<compile_context>
chip_gen: v5e
topology: v5e:2x2
jax: 0.10.0
libtpu: 0.0.40
codegen_flags: <defaults>
</compile_context>

<pallas_src>
import math

import jax
import jax.numpy as jnp
from jax.experimental import pallas as pl
from jax.experimental.pallas import tpu as pltpu


def _round_up(x: int, m: int) -> int:
    return ((x + m - 1) // m) * m


def _proj_kernel(x_ref, w_ref, b_ref, o_ref):
    # x_ref: (tm, K) f32   (streamed over the M grid axis)
    # w_ref: (K, np_) bf16 (VMEM-resident: same block for every grid step)
    # b_ref: (1, np_) f32  (VMEM-resident)
    # o_ref: (tm, np_) f32
    x = x_ref[...].astype(jnp.bfloat16)          # VPU cast on the VMEM tile
    o_ref[...] = (
        jnp.dot(x, w_ref[...], preferred_element_type=jnp.float32)
        + b_ref[...]                              # broadcast (1, np_) -> (tm, np_)
    )


def pack_params(weight_t, bias):
    """One-time packing of the Linear parameters into kernel layout.

    Args:
      weight_t: (input_size, 7*num_ids) float32  (transposed PyTorch weight)
      bias:     (7*num_ids,) float32
    Returns:
      w_packed: (input_size, np_) bfloat16, N zero-padded to a multiple of 128
      b_packed: (1, np_) float32, zero-padded
    """
    d_in, d_out = weight_t.shape
    np_ = _round_up(d_out, 128)
    w_packed = jnp.zeros((d_in, np_), jnp.bfloat16).at[:, :d_out].set(
        weight_t.astype(jnp.bfloat16))
    b_packed = jnp.zeros((1, np_), jnp.float32).at[0, :d_out].set(
        bias.astype(jnp.float32))
    return w_packed, b_packed


def _fit_tm(tm: int, input_size: int, np_: int) -> int:
    """Shrink tm until the double-buffered working set fits a ~24 MiB budget."""
    budget = 24 * 1024 * 1024
    while tm > 16:
        x_bytes = 2 * tm * input_size * 4          # f32 x tile, double-buffered
        o_bytes = 2 * tm * np_ * 4                 # f32 out tile, double-buffered
        w_bytes = 2 * input_size * np_ * 2         # bf16 weight (resident, 2 bufs)
        b_bytes = 2 * np_ * 4
        if x_bytes + o_bytes + w_bytes + b_bytes <= budget:
            break
        tm //= 2
    return max(tm, 16)


def factorized_projection_forward(inp, w_packed, b_packed, num_ids, *, tm: int = 512):
    """Pallas forward pass.

    Args:
      inp:      (batch, input_size) float32
      w_packed: (input_size, np_) bfloat16  from pack_params()
      b_packed: (1, np_) float32            from pack_params()
      num_ids:  len(env.abc)
    Returns:
      (batch, 7, num_ids) float32
    """
    assert inp.ndim == 2, "FactorizedProjection expects a 2-D input"
    batch, input_size = inp.shape
    assert w_packed.shape[0] == input_size
    np_ = w_packed.shape[1]
    d_out = 7 * num_ids
    assert np_ >= d_out and np_ % 128 == 0
    assert b_packed.shape == (1, np_)

    # bf16 operands pack 2 rows / sublane -> keep the M tile a multiple of 16.
    tm = min(tm, _round_up(batch, 16))
    tm = _fit_tm(tm, input_size, np_)

    mp = _round_up(batch, tm)
    # Pad only M, and only if needed; K is a full-array-dim block (no K pad).
    x = inp if mp == batch else jnp.pad(inp, ((0, mp - batch), (0, 0)))

    grid = (mp // tm,)

    # Honest traffic estimate for the single-pass structure.
    cost = pl.CostEstimate(
        flops=2 * mp * input_size * np_,
        transcendentals=0,
        bytes_accessed=(mp * input_size * 4        # x read (f32)
                        + input_size * np_ * 2     # weight read once (bf16)
                        + np_ * 4                  # bias read once
                        + mp * np_ * 4),           # output write (f32)
    )

    out = pl.pallas_call(
        _proj_kernel,
        out_shape=jax.ShapeDtypeStruct((mp, np_), jnp.float32),
        grid_spec=pltpu.PrefetchScalarGridSpec(
            num_scalar_prefetch=0,
            grid=grid,
            in_specs=[
                # Streaming activations: new M tile per grid step.
                pl.BlockSpec((tm, input_size), lambda i: (i, 0)),
                # Weight / bias: same block every step -> VMEM-resident.
                pl.BlockSpec((input_size, np_), lambda i: (0, 0)),
                pl.BlockSpec((1, np_), lambda i: (0, 0)),
            ],
            out_specs=pl.BlockSpec((tm, np_), lambda i: (i, 0)),
        ),
        compiler_params=pltpu.CompilerParams(
            # Single M axis, parallel -> shards across v7x's 2 TensorCores.
            dimension_semantics=("parallel",),
            vmem_limit_bytes=32 * 1024 * 1024,
        ),
        cost_estimate=cost,
    )(x, w_packed, b_packed)

    # Slice away padding, then the .view(-1, 7, num_ids) glue.
    # TODO(synk): torch named-tensor .rename('batch','phase','action') has no
    # JAX equivalent; the plain reshape preserves the data layout/semantics.
    return out[:batch, :d_out].reshape(batch, 7, num_ids)


def init_params(key, input_size, num_ids):
    """Deterministic init matching nn.Linear defaults (uniform +/- 1/sqrt(fan_in))."""
    d_out = 7 * num_ids
    kw, kb = jax.random.split(key)
    bound = 1.0 / math.sqrt(input_size)
    # PyTorch stores weight as (out, in); we keep the transposed (in, out) layout.
    weight_t = jax.random.uniform(
        kw, (input_size, d_out), jnp.float32, minval=-bound, maxval=bound)
    bias = jax.random.uniform(
        kb, (d_out,), jnp.float32, minval=-bound, maxval=bound)
    return weight_t, bias


if __name__ == "__main__":
    key = jax.random.PRNGKey(0)
    k_inp, k_param = jax.random.split(key)

    batch = 8
    input_size = 32
    num_ids = 16          # len(env.abc)

    inp = jax.random.normal(k_inp, (batch, input_size), jnp.float32)
    weight_t, bias = init_params(k_param, input_size, num_ids)

    # One-time parameter packing (done at module init in a real model).
    w_packed, b_packed = pack_params(weight_t, bias)

    potentials = jax.block_until_ready(
        factorized_projection_forward(inp, w_packed, b_packed, num_ids))

    assert potentials.shape == (batch, 7, num_ids)
    assert potentials.dtype == jnp.float32

    # Reference with the same bf16-operand / f32-accumulate numerics.
    ref_bf16 = (jnp.dot(inp.astype(jnp.bfloat16), weight_t.astype(jnp.bfloat16),
                        preferred_element_type=jnp.float32)
                + bias).reshape(batch, 7, num_ids)
    assert jnp.allclose(potentials, ref_bf16, atol=5e-3, rtol=5e-3)

    # Loose sanity check against the full-f32 reference (bf16 rounding is a
    # deliberate deviation from PyTorch's f32 nn.Linear).
    ref_f32 = (inp @ weight_t + bias).reshape(batch, 7, num_ids)
    assert jnp.allclose(potentials, ref_f32, atol=5e-2, rtol=5e-2)

    print("KERNEL_OK")
</pallas_src>

<mosaic_0001>
module attributes {stable_mosaic.version = 11 : i64} {
  func.func @_proj_kernel(%arg0: i32, %arg1: memref<16x32xf32, #tpu.memory_space<vmem>>, %arg2: memref<32x128xbf16, #tpu.memory_space<vmem>>, %arg3: memref<1x128xf32, #tpu.memory_space<vmem>>, %arg4: memref<16x128xf32, #tpu.memory_space<vmem>>) attributes {dimension_semantics = [#tpu.dimension_semantics<parallel>], iteration_bounds = array<i64: 1>, scalar_prefetch = 0 : i64, scratch_operands = 0 : i64, tpu.core_type = #tpu.core_type<tc>, window_params = [{transform_indices = @transform_0, window_bounds = array<i64: 16, 32>}, {pipeline_mode = #tpu.pipeline_mode<synchronous>, transform_indices = @transform_1, window_bounds = array<i64: 32, 128>}, {pipeline_mode = #tpu.pipeline_mode<synchronous>, transform_indices = @transform_2, window_bounds = array<i64: 1, 128>}, {transform_indices = @transform_3, window_bounds = array<i64: 16, 128>}]} {
    %c0 = arith.constant 0 : index
    %c0_0 = arith.constant 0 : index
    %0 = vector.load %arg1[%c0, %c0_0] : memref<16x32xf32, #tpu.memory_space<vmem>>, vector<16x32xf32>
    %1 = arith.truncf %0 : vector<16x32xf32> to vector<16x32xbf16>
    %c0_1 = arith.constant 0 : index
    %c0_2 = arith.constant 0 : index
    %2 = vector.load %arg2[%c0_1, %c0_2] : memref<32x128xbf16, #tpu.memory_space<vmem>>, vector<32x128xbf16>
    %cst = arith.constant dense<0.000000e+00> : vector<16x128xf32>
    %3 = tpu.matmul %1, %2, %cst {dimension_numbers = #tpu.dot_dimension_numbers<[1], [0], [0], [1], [0, 0, 1, 1], [], []>} : vector<16x32xbf16>, vector<32x128xbf16>, vector<16x128xf32> -> vector<16x128xf32>
    %c0_3 = arith.constant 0 : index
    %c0_4 = arith.constant 0 : index
    %4 = vector.load %arg3[%c0_3, %c0_4] : memref<1x128xf32, #tpu.memory_space<vmem>>, vector<1x128xf32>
    %5 = vector.broadcast %4 : vector<1x128xf32> to vector<16x128xf32>
    %6 = arith.addf %3, %5 : vector<16x128xf32>
    %c0_5 = arith.constant 0 : index
    %c0_6 = arith.constant 0 : index
    %7 = vector.load %arg4[%c0_5, %c0_6] : memref<16x128xf32, #tpu.memory_space<vmem>>, vector<16x128xf32>
    tpu.vector_store %arg4[%c0_5, %c0_6], %6 {strides = array<i32>} : memref<16x128xf32, #tpu.memory_space<vmem>>, vector<16x128xf32>,
    return
  }
  func.func @transform_0(%arg0: i32) -> (i32, i32) {
    %c0_i32 = arith.constant 0 : i32
    %c0_i32_0 = arith.constant 0 : i32
    return %arg0, %c0_i32 : i32, i32
  }
  func.func @transform_1(%arg0: i32) -> (i32, i32) {
    %c0_i32 = arith.constant 0 : i32
    %c0_i32_0 = arith.constant 0 : i32
    %c0_i32_1 = arith.constant 0 : i32
    return %c0_i32, %c0_i32_0 : i32, i32
  }
  func.func @transform_2(%arg0: i32) -> (i32, i32) {
    %c0_i32 = arith.constant 0 : i32
    %c0_i32_0 = arith.constant 0 : i32
    %c0_i32_1 = arith.constant 0 : i32
    return %c0_i32, %c0_i32_0 : i32, i32
  }
  func.func @transform_3(%arg0: i32) -> (i32, i32) {
    %c0_i32 = arith.constant 0 : i32
    %c0_i32_0 = arith.constant 0 : i32
    return %arg0, %c0_i32 : i32, i32
  }
}

</mosaic_0001>

<llo_original>
// kernel: tpu_custom_call.1
$region0: #{tpu_custom_call.1}
  #allocation0 [shape = 'u32[]', space=smem, size = 0x4, offset = 0x4, fixed_abs, tag = 'smem constant byte address 0x4 - core index']
  #allocation1 [shape = 'u32[72,128]{1,0:T(1,128)}', space=vmem, size = 0x9000, scoped, tag = 'internal scratch']
  %s0 = inlined_call_operand.hbm [shape: f32[16,32], index: 0, kind: input, shape index: {}]
  %s1 = inlined_call_operand.hbm [shape: bf16[32,128], index: 1, kind: input, shape index: {}]
  %s2 = inlined_call_operand.vmem [shape: f32[1,128], index: 2, kind: input, shape index: {}]
  %s3 = inlined_call_operand.hbm [shape: f32[16,128], index: 3, kind: output, shape index: {}]
  %s4 = sld [smem:[#allocation0]]
  $region30: #{tpu_custom_call.1} parent=0
    _
  %s6 = ssub.s32 1, %s4
  %s7 = scalar_select 0, %s6, %s4
  $region1: #{tpu_custom_call.1} parent=0
    #allocation2 [shape = 'u8[8192]{0}', space=vmem, size = 0x2000, scoped, tag = 'input window, operand 0, single buffered']
    #allocation3 [shape = 's32[1]{0}', space=sflag, size = 0x4, scoped, tag = 'scoped memory for tpu_custom_call.1']
    #allocation4 [shape = 's32[1]{0}', space=sflag, size = 0x4, scoped, tag = 'scoped memory for tpu_custom_call.1']
    #allocation5 [shape = 'u8[8192]{0}', space=vmem, size = 0x2000, scoped, tag = 'input window, operand 1, single buffered']
    #allocation6 [shape = 's32[1]{0}', space=sflag, size = 0x4, scoped, tag = 'scoped memory for tpu_custom_call.1']
    #allocation7 [shape = 'u8[8192]{0}', space=vmem, size = 0x2000, scoped, tag = 'output window, operand 0, single buffered']
    %8 = vsyncpa [#allocation3], 0
    %9 = vsyncpa [#allocation6], 0
    %10 = vsyncpa [#allocation4], 0
    // Predicated region
    $region2: #{tpu_custom_call.1} parent=1 // pred_check
      _
    $region3: #{tpu_custom_call.1} parent=1 // pred_check_branch
      %12 = sbr.rel (0) target = $region5
    $region4: #{tpu_custom_call.1} parent=1 // pred_region
      %14 = vsyncadd [#allocation3], 0
      %s15 = sshll.u32 %s0, 4
      %s16 = int_to_ptr.hbm [resolvable:$true] %s15
      %s17 = sshll.u32 [#allocation2], 4
      %s18 = int_to_ptr.vmem [resolvable:$true] %s17
      %23 = dma.hbm_to_vmem [thread:$0]  %s16, 256, %s18, [#allocation3], 128, 128, 8
    $region5: #{tpu_custom_call.1} parent=1 // pred_fallthru
      _
    // Predicated region
    $region6: #{tpu_custom_call.1} parent=1 // pred_check
      _
    $region7: #{tpu_custom_call.1} parent=1 // pred_check_branch
      %25 = sbr.rel (0) target = $region9
    $region8: #{tpu_custom_call.1} parent=1 // pred_region
      %27 = vsyncadd [#allocation6], 0
      %s28 = sshll.u32 %s1, 4
      %s29 = int_to_ptr.hbm [resolvable:$true] %s28
      %s30 = sshll.u32 [#allocation5], 4
      %s31 = int_to_ptr.vmem [resolvable:$true] %s30
      %36 = dma.hbm_to_vmem [thread:$0]  %s29, 256, %s31, [#allocation6], 64, 64, 4
    $region9: #{tpu_custom_call.1} parent=1 // pred_fallthru
      _
    // Predicated region
    $region10: #{tpu_custom_call.1} parent=1 // pred_check
      _
    $region11: #{tpu_custom_call.1} parent=1 // pred_check_branch
      %38 = sbr.rel (0) target = $region13
    $region12: #{tpu_custom_call.1} parent=1 // pred_region
      _
    $region13: #{tpu_custom_call.1} parent=1 // pred_fallthru
      _
    // Predicated region
    $region14: #{tpu_custom_call.1} parent=1 // pred_check
      _
    $region15: #{tpu_custom_call.1} parent=1 // pred_check_branch
      %40 = sbr.rel (0) target = $region17
    $region16: #{tpu_custom_call.1} parent=1 // pred_region
      %42 = dma.done [#allocation3], 256
    $region17: #{tpu_custom_call.1} parent=1 // pred_fallthru
      _
    // Predicated region
    $region18: #{tpu_custom_call.1} parent=1 // pred_check
      _
    $region19: #{tpu_custom_call.1} parent=1 // pred_check_branch
      %44 = sbr.rel (0) target = $region21
    $region20: #{tpu_custom_call.1} parent=1 // pred_region
      %46 = dma.done [#allocation6], 256
    $region21: #{tpu_custom_call.1} parent=1 // pred_fallthru
      _
    %v48 = vld [vmem:[#allocation2] sm:$0xff]
    %v49 = vld [vmem:[#allocation2 + $0x8] sm:$0xff]
    %v50 = vpack.c.bf16 %v49, %v48
    %v51 = vld [vmem:[#allocation5] sm:$0xf]
    %v52 = vld [vmem:[#allocation5 + $0x4] sm:$0xf]
    %v53 = vld [vmem:[#allocation5 + $0x8] sm:$0xf]
    %v54 = vld [vmem:[#allocation5 + $0xc] sm:$0xf]
    %v55 = vld [vmem:[%s2] sm:$0x1]
    %v57 = vperm.slane %v55, 0
    %v63 = vunpack.c.l.b16 %v51
    %v64 = vunpack.c.l.b16 %v52
    %v65 = vunpack.c.l.b16 %v53
    %v66 = vunpack.c.l.b16 %v54
    %v67 = vpack.c.b16 %v64, %v63
    %v68 = vpack.c.b16 %v66, %v65
    %vm71 = vcmask 261120
    %v73 = vsel %vm71, %v50, 0
    %75 = vmatpush.bf16.msra.mxu0 0
    %76 = vmatpush.bf16.msra.mxu0 0
    %77 = vmatpush.bf16.msra.mxu0 0
    %78 = vmatpush.bf16.msra.mxu0 0
    %79 = vmatpush.bf16.msra.mxu0 0
    %80 = vmatpush.bf16.msra.mxu0 0
    %81 = vmatpush.bf16.msra.mxu0 %v68
    %82 = vmatpush.bf16.msra.mxu0 %v67
    %83 = vmatmul.bf16.gmra.mxu0 %v73
    %v84 = vpop.f32.mrf.mxu0
    %v85 = vadd.f32 %v57, %v84
    %v86 = vpop.f32.mrf.mxu0
    %v87 = vadd.f32 %v57, %v86
    %88 = vdwg.mxu0
    %89 = vst [vmem:[#allocation7] sm:$0xff] %v85
    %90 = vst [vmem:[#allocation7 + $0x8] sm:$0xff] %v87
    // Predicated region
    $region22: #{tpu_custom_call.1} parent=1 // pred_check
      _
    $region23: #{tpu_custom_call.1} parent=1 // pred_check_branch
      %92 = sbr.rel (0) target = $region25
    $region24: #{tpu_custom_call.1} parent=1 // pred_region
      %94 = vsyncadd [#allocation4], 0
      %s95 = sshll.u32 [#allocation7], 4
      %s96 = int_to_ptr.vmem [resolvable:$true] %s95
      %s97 = sshll.u32 %s3, 4
      %s98 = int_to_ptr.hbm [resolvable:$true] %s97
      %103 = dma.vmem_to_hbm [thread:$0]  %s96, 256, %s98, [#allocation4], 128, 128, 8
    $region25: #{tpu_custom_call.1} parent=1 // pred_fallthru
      _
    // Predicated region
    $region26: #{tpu_custom_call.1} parent=1 // pred_check
      _
    $region27: #{tpu_custom_call.1} parent=1 // pred_check_branch
      %105 = sbr.rel (0) target = $region29
    $region28: #{tpu_custom_call.1} parent=1 // pred_region
      %107 = dma.done [#allocation4], 256
    $region29: #{tpu_custom_call.1} parent=1 // pred_fallthru
      _
    %108 = vsyncpa [#allocation3], 1
    %109 = vsyncpa [#allocation6], 1
    %110 = vsyncpa [#allocation4], 1

</llo_original>
